<compile_context>
chip_gen: v6e
topology: v6e:2x2x1
jax: 0.10.0
libtpu: 0.0.40
codegen_flags: <defaults>
</compile_context>

<pallas_src>
import functools

import jax
import jax.numpy as jnp
from jax.experimental import pallas as pl
from jax.experimental.pallas import tpu as pltpu

F_IN = 30          # feature width of the model
_SLAB_ROWS = 72    # param slab rows (multiple of 8, weight blocks at 32-aligned offsets)
_SLAB_COLS = 32    # param slab cols


def _mlp_kernel(x_ref, p_ref, o_ref, *, matmul_dtype):
    # Parameter slab: constant block index across the grid -> DMA'd once, VMEM-resident.
    p = p_ref[...]                               # (72, 32) f32
    w1t = p[0:F_IN, 0:F_IN]                      # (30, 30)  == W1.T  (x @ W1.T form)
    w2t = p[32:32 + F_IN, 0:F_IN]                # (30, 30)  == W2.T
    b1 = p[64:65, 0:F_IN]                        # (1, 30)
    b2 = p[65:66, 0:F_IN]                        # (1, 30)
    w3 = p[66:67, 0:F_IN]                        # (1, 30)   fc3 weight row
    b3 = p[67:68, 0:1]                           # (1, 1)

    x = x_ref[...]                               # (TB, 30) f32, batch on sublanes

    def mm(a, w):
        # MXU matmul; optionally bf16 operands, always f32 accumulation.
        return jnp.dot(a.astype(matmul_dtype), w.astype(matmul_dtype),
                       preferred_element_type=jnp.float32)

    # layer 1: relu(x @ W1^T + b1 + x)   (bias / residual adds in f32 on the VPU)
    h1 = jnp.maximum(mm(x, w1t) + b1 + x, 0.0)
    # layer 2: relu(h1 @ W2^T + b2 + h1)
    h2 = jnp.maximum(mm(h1, w2t) + b2 + h1, 0.0)
    # layer 3 (out_features == 1): VPU multiply + XLU lane reduction -> (TB, 1);
    # no MXU push/drain for a single useful output column.
    out = jnp.sum(h2 * w3, axis=1, keepdims=True) + b3
    o_ref[...] = out.astype(o_ref.dtype)


def _round_up(n, m):
    return ((n + m - 1) // m) * m


def pack_params(w1, b1, w2, b2, w3, b3):
    """Pack all fc weights/biases (PyTorch (out, in) layout) into one (72, 32) slab.
    Weights are stored transposed so the kernel computes x @ W^T directly."""
    p = jnp.zeros((_SLAB_ROWS, _SLAB_COLS), jnp.float32)
    p = p.at[0:F_IN, 0:F_IN].set(w1.T)
    p = p.at[32:32 + F_IN, 0:F_IN].set(w2.T)
    p = p.at[64, 0:F_IN].set(b1)
    p = p.at[65, 0:F_IN].set(b2)
    p = p.at[66, 0:F_IN].set(w3[0, :])
    p = p.at[67, 0].set(b3[0])
    return p


@functools.partial(jax.jit, static_argnames=("block_b", "matmul_dtype"))
def breast_cancer_model_forward(x, packed_params, *, block_b=1024,
                                matmul_dtype=jnp.float32):
    """x: (B, 30) float32. packed_params: (72, 32) slab from pack_params. Returns (B, 1)."""
    B, F = x.shape
    assert F == F_IN, F

    # Batch tile: batch lives on sublanes, so only 8-alignment is required.
    tb = min(_round_up(block_b, 8), _round_up(B, 8))
    b_pad = _round_up(B, tb)
    if b_pad != B:
        x = jnp.pad(x, ((0, b_pad - B), (0, 0)))   # zero-pad ragged last tile

    kernel = functools.partial(_mlp_kernel, matmul_dtype=matmul_dtype)
    out = pl.pallas_call(
        kernel,
        out_shape=jax.ShapeDtypeStruct((b_pad, 1), jnp.float32),
        grid=(b_pad // tb,),
        in_specs=[
            pl.BlockSpec((tb, F_IN), lambda i: (i, 0)),              # batch-tiled input
            pl.BlockSpec((_SLAB_ROWS, _SLAB_COLS), lambda i: (0, 0)),  # params: resident
        ],
        out_specs=pl.BlockSpec((tb, 1), lambda i: (i, 0)),
        compiler_params=pltpu.CompilerParams(
            dimension_semantics=("parallel",)),                       # v7x: both TCs
    )(x, packed_params)

    return out[:B]


def init_params(key):
    """PyTorch nn.Linear default init: U(-1/sqrt(fan_in), 1/sqrt(fan_in)).
    Weights kept in PyTorch (out_features, in_features) layout."""
    ks = jax.random.split(key, 6)

    def uniform(k, shape, fan_in):
        bound = 1.0 / jnp.sqrt(fan_in)
        return jax.random.uniform(k, shape, jnp.float32, -bound, bound)

    return {
        "w1": uniform(ks[0], (30, 30), 30.0), "b1": uniform(ks[1], (30,), 30.0),
        "w2": uniform(ks[2], (30, 30), 30.0), "b2": uniform(ks[3], (30,), 30.0),
        "w3": uniform(ks[4], (1, 30), 30.0),  "b3": uniform(ks[5], (1,), 30.0),
    }


def reference_forward(x, p):
    h1 = jnp.maximum(x @ p["w1"].T + p["b1"] + x, 0.0)
    h2 = jnp.maximum(h1 @ p["w2"].T + p["b2"] + h1, 0.0)
    return h2 @ p["w3"].T + p["b3"]


if __name__ == "__main__":
    key = jax.random.PRNGKey(0)
    k_x, k_p = jax.random.split(key)

    params = init_params(k_p)
    packed = pack_params(**params)

    # Small-batch correctness check (f32 matmuls: exact module semantics).
    x_small = jax.random.normal(k_x, (8, F_IN), jnp.float32)
    out = jax.block_until_ready(breast_cancer_model_forward(x_small, packed))
    ref = reference_forward(x_small, params)
    assert out.shape == (8, 1), out.shape
    assert jnp.allclose(out, ref, atol=1e-4, rtol=1e-4)

    # Multi-tile grid with a ragged batch (exercises padding + block reuse of params).
    x_big = jax.random.normal(k_x, (1000, F_IN), jnp.float32)
    out_big = jax.block_until_ready(
        breast_cancer_model_forward(x_big, packed, block_b=256))
    ref_big = reference_forward(x_big, params)
    assert out_big.shape == (1000, 1)
    assert jnp.allclose(out_big, ref_big, atol=1e-4, rtol=1e-4)

    # bf16 MXU-operand fast path (v6e/v7x); adds/accumulation stay f32.
    out_bf16 = jax.block_until_ready(
        breast_cancer_model_forward(x_big, packed, block_b=256,
                                    matmul_dtype=jnp.bfloat16))
    assert jnp.allclose(out_bf16, ref_big, atol=5e-2, rtol=5e-2)

    print("KERNEL_OK")
</pallas_src>

<mosaic_0001>
module attributes {stable_mosaic.version = 11 : i64} {
  func.func @_mlp_kernel(%arg0: i32, %arg1: memref<8x30xf32, #tpu.memory_space<vmem>>, %arg2: memref<72x32xf32, #tpu.memory_space<vmem>>, %arg3: memref<8x1xf32, #tpu.memory_space<vmem>>) attributes {dimension_semantics = [#tpu.dimension_semantics<parallel>], iteration_bounds = array<i64: 1>, scalar_prefetch = 0 : i64, scratch_operands = 0 : i64, tpu.core_type = #tpu.core_type<tc>, window_params = [{transform_indices = @transform_0, window_bounds = array<i64: 8, 30>}, {pipeline_mode = #tpu.pipeline_mode<synchronous>, transform_indices = @transform_1, window_bounds = array<i64: 72, 32>}, {transform_indices = @transform_2, window_bounds = array<i64: 8, 1>}]} {
    %c0 = arith.constant 0 : index
    %c0_0 = arith.constant 0 : index
    %0 = vector.load %arg2[%c0, %c0_0] : memref<72x32xf32, #tpu.memory_space<vmem>>, vector<72x32xf32>
    %1 = vector.extract_strided_slice %0 {offsets = [0, 0], sizes = [30, 30], strides = [1, 1]} : vector<72x32xf32> to vector<30x30xf32>
    %2 = vector.extract_strided_slice %0 {offsets = [32, 0], sizes = [30, 30], strides = [1, 1]} : vector<72x32xf32> to vector<30x30xf32>
    %3 = vector.extract_strided_slice %0 {offsets = [64, 0], sizes = [1, 30], strides = [1, 1]} : vector<72x32xf32> to vector<1x30xf32>
    %4 = vector.extract_strided_slice %0 {offsets = [65, 0], sizes = [1, 30], strides = [1, 1]} : vector<72x32xf32> to vector<1x30xf32>
    %5 = vector.extract_strided_slice %0 {offsets = [66, 0], sizes = [1, 30], strides = [1, 1]} : vector<72x32xf32> to vector<1x30xf32>
    %6 = vector.extract_strided_slice %0 {offsets = [67, 0], sizes = [1, 1], strides = [1, 1]} : vector<72x32xf32> to vector<1x1xf32>
    %c0_1 = arith.constant 0 : index
    %c0_2 = arith.constant 0 : index
    %7 = vector.load %arg1[%c0_1, %c0_2] : memref<8x30xf32, #tpu.memory_space<vmem>>, vector<8x30xf32>
    %cst = arith.constant dense<0.000000e+00> : vector<8x30xf32>
    %8 = tpu.matmul %7, %1, %cst {dimension_numbers = #tpu.dot_dimension_numbers<[1], [0], [0], [1], [0, 0, 1, 1], [], []>} : vector<8x30xf32>, vector<30x30xf32>, vector<8x30xf32> -> vector<8x30xf32>
    %9 = vector.broadcast %3 : vector<1x30xf32> to vector<8x30xf32>
    %10 = arith.addf %8, %9 : vector<8x30xf32>
    %11 = arith.addf %10, %7 : vector<8x30xf32>
    %cst_3 = arith.constant 0.000000e+00 : f32
    %12 = vector.broadcast %cst_3 : f32 to vector<8x30xf32>
    %13 = arith.maximumf %11, %12 : vector<8x30xf32>
    %cst_4 = arith.constant dense<0.000000e+00> : vector<8x30xf32>
    %14 = tpu.matmul %13, %2, %cst_4 {dimension_numbers = #tpu.dot_dimension_numbers<[1], [0], [0], [1], [0, 0, 1, 1], [], []>} : vector<8x30xf32>, vector<30x30xf32>, vector<8x30xf32> -> vector<8x30xf32>
    %15 = vector.broadcast %4 : vector<1x30xf32> to vector<8x30xf32>
    %16 = arith.addf %14, %15 : vector<8x30xf32>
    %17 = arith.addf %16, %13 : vector<8x30xf32>
    %cst_5 = arith.constant 0.000000e+00 : f32
    %18 = vector.broadcast %cst_5 : f32 to vector<8x30xf32>
    %19 = arith.maximumf %17, %18 : vector<8x30xf32>
    %20 = vector.broadcast %5 : vector<1x30xf32> to vector<8x30xf32>
    %21 = arith.mulf %19, %20 : vector<8x30xf32>
    %cst_6 = arith.constant dense<0.000000e+00> : vector<8xf32>
    %22 = vector.multi_reduction <add>, %21, %cst_6 [1] : vector<8x30xf32> to vector<8xf32>
    %23 = vector.shape_cast %22 : vector<8xf32> to vector<8x1xf32>
    %24 = vector.broadcast %6 : vector<1x1xf32> to vector<8x1xf32>
    %25 = arith.addf %23, %24 : vector<8x1xf32>
    %c0_7 = arith.constant 0 : index
    %c0_8 = arith.constant 0 : index
    %26 = vector.load %arg3[%c0_7, %c0_8] : memref<8x1xf32, #tpu.memory_space<vmem>>, vector<8x1xf32>
    tpu.vector_store %arg3[%c0_7, %c0_8], %25 {strides = array<i32>} : memref<8x1xf32, #tpu.memory_space<vmem>>, vector<8x1xf32>,
    return
  }
  func.func @transform_0(%arg0: i32) -> (i32, i32) {
    %c0_i32 = arith.constant 0 : i32
    %c0_i32_0 = arith.constant 0 : i32
    return %arg0, %c0_i32 : i32, i32
  }
  func.func @transform_1(%arg0: i32) -> (i32, i32) {
    %c0_i32 = arith.constant 0 : i32
    %c0_i32_0 = arith.constant 0 : i32
    %c0_i32_1 = arith.constant 0 : i32
    return %c0_i32, %c0_i32_0 : i32, i32
  }
  func.func @transform_2(%arg0: i32) -> (i32, i32) {
    %c0_i32 = arith.constant 0 : i32
    %c0_i32_0 = arith.constant 0 : i32
    return %arg0, %c0_i32 : i32, i32
  }
}

</mosaic_0001>

<llo_original>
// kernel: breast_cancer_model_forward.1
$region0: #{breast_cancer_model_forward.1}
  #allocation0 [shape = 'u32[]', space=smem, size = 0x4, offset = 0x4, fixed_abs, tag = 'smem constant byte address 0x4 - core index']
  #allocation1 [shape = 'u32[144,128]{1,0:T(1,128)}', space=vmem, size = 0x12000, scoped, tag = 'internal scratch']
  %s0 = inlined_call_operand.vmem [shape: f32[8,30], index: 0, kind: input, shape index: {}]
  %s1 = inlined_call_operand.vmem [shape: f32[72,32], index: 1, kind: input, shape index: {}]
  %s2 = inlined_call_operand.vmem [shape: f32[8,1], index: 2, kind: output, shape index: {}]
  %s3 = sld [smem:[#allocation0]]
  $region18: #{breast_cancer_model_forward.1} parent=0
    _
  %s5 = ssub.s32 1, %s3
  %s6 = scalar_select 0, %s5, %s3
  // Predicated region
  $region2: #{breast_cancer_model_forward.1} parent=0 // pred_check
    _
  $region3: #{breast_cancer_model_forward.1} parent=0 // pred_check_branch
    %8 = sbr.rel (0) target = $region5
  $region4: #{breast_cancer_model_forward.1} parent=0 // pred_region
    _
  $region5: #{breast_cancer_model_forward.1} parent=0 // pred_fallthru
    _
  // Predicated region
  $region6: #{breast_cancer_model_forward.1} parent=0 // pred_check
    _
  $region7: #{breast_cancer_model_forward.1} parent=0 // pred_check_branch
    %10 = sbr.rel (0) target = $region9
  $region8: #{breast_cancer_model_forward.1} parent=0 // pred_region
    _
  $region9: #{breast_cancer_model_forward.1} parent=0 // pred_fallthru
    _
  %v11 = vld [vmem:[%s1] sm:$0xff]
  %v12 = vld [vmem:[%s1 + $0x8] sm:$0xff]
  %v13 = vld [vmem:[%s1 + $0x10] sm:$0xff]
  %v14 = vld [vmem:[%s1 + $0x18] sm:$0xff]
  %v15 = vld [vmem:[%s1 + $0x20] sm:$0xff]
  %v16 = vld [vmem:[%s1 + $0x28] sm:$0xff]
  %v17 = vld [vmem:[%s1 + $0x30] sm:$0xff]
  %v18 = vld [vmem:[%s1 + $0x38] sm:$0xff]
  %v19 = vld [vmem:[%s1 + $0x40] sm:$0xff]
  %v20 = vld [vmem:[%s0] sm:$0xff]
  %v21 = vlaneseq
  %v22 = vshrl.u32 %v21, 7
  %v23 = vsub.s32 0, %v22
  %v24 = vrot.slane %v19, %v23
  %vm25 = vcmask 244736
  %v27 = vsel %vm25, %v20, 0
  %vm29 = vcmask 1045504
  %v31 = vsel %vm29, %v14, 0
  %33 = vmatprep.subr.mxu0 0.0
  %34 = vmatpush1.msra.mxu0 0.0
  %35 = vmatprep.subr.mxu0 0.0
  %36 = vmatpush1.msra.mxu0 0.0
  %37 = vmatprep.subr.mxu0 0.0
  %38 = vmatpush1.msra.mxu0 0.0
  %39 = vmatprep.subr.mxu0 0.0
  %40 = vmatpush1.msra.mxu0 0.0
  %41 = vmatprep.subr.mxu0 0.0
  %42 = vmatpush1.msra.mxu0 0.0
  %43 = vmatprep.subr.mxu0 0.0
  %44 = vmatpush1.msra.mxu0 0.0
  %45 = vmatprep.subr.mxu0 0.0
  %46 = vmatpush1.msra.mxu0 0.0
  %47 = vmatprep.subr.mxu0 0.0
  %48 = vmatpush1.msra.mxu0 0.0
  %49 = vmatprep.subr.mxu0 0.0
  %50 = vmatpush1.msra.mxu0 0.0
  %51 = vmatprep.subr.mxu0 0.0
  %52 = vmatpush1.msra.mxu0 0.0
  %53 = vmatprep.subr.mxu0 0.0
  %54 = vmatpush1.msra.mxu0 0.0
  %55 = vmatprep.subr.mxu0 0.0
  %56 = vmatpush1.msra.mxu0 0.0
  %57 = vmatprep.subr.mxu0 0.0
  %58 = vmatpush1.msra.mxu0 %v31
  %59 = vmatprep.subr.mxu0 0.0
  %60 = vmatpush1.msra.mxu0 %v13
  %61 = vmatprep.subr.mxu0 0.0
  %62 = vmatpush1.msra.mxu0 %v12
  %63 = vmatprep.subr.mxu0 0.0
  %64 = vmatpush1.msra.mxu0 %v11
  %65 = vmatprep.subr.mxu0 0.0
  %66 = vmatpush2.msra.mxu0 0.0
  %67 = vmatprep.subr.mxu0 0.0
  %68 = vmatpush2.msra.mxu0 0.0
  %69 = vmatprep.subr.mxu0 0.0
  %70 = vmatpush2.msra.mxu0 0.0
  %71 = vmatprep.subr.mxu0 0.0
  %72 = vmatpush2.msra.mxu0 0.0
  %73 = vmatprep.subr.mxu0 0.0
  %74 = vmatpush2.msra.mxu0 0.0
  %75 = vmatprep.subr.mxu0 0.0
  %76 = vmatpush2.msra.mxu0 0.0
  %77 = vmatprep.subr.mxu0 0.0
  %78 = vmatpush2.msra.mxu0 0.0
  %79 = vmatprep.subr.mxu0 0.0
  %80 = vmatpush2.msra.mxu0 0.0
  %81 = vmatprep.subr.mxu0 0.0
  %82 = vmatpush2.msra.mxu0 0.0
  %83 = vmatprep.subr.mxu0 0.0
  %84 = vmatpush2.msra.mxu0 0.0
  %85 = vmatprep.subr.mxu0 0.0
  %86 = vmatpush2.msra.mxu0 0.0
  %87 = vmatprep.subr.mxu0 0.0
  %88 = vmatpush2.msra.mxu0 0.0
  %89 = vmatprep.subr.mxu0 0.0
  %90 = vmatpush2.msra.mxu0 0.0
  %91 = vmatprep.subr.mxu0 0.0
  %92 = vmatpush2.msra.mxu0 0.0
  %93 = vmatprep.subr.mxu0 0.0
  %94 = vmatpush2.msra.mxu0 0.0
  %95 = vmatprep.subr.mxu0 0.0
  %96 = vmatpush2.msra.mxu0 0.0
  %97 = vmatprep.mubr.f32.mxu0 0.0
  %98 = vmatmul.mubr.f32.gmra.mxu0 %v27
  %v99 = vpop.f32.mrf.mxu0
  %v100 = vadd.f32 %v24, %v99
  %v101 = vpop.f32.mrf.mxu0
  %102 = vdwg.mxu0
  %v103 = vadd.f32 %v100, %v20
  %v104 = vmax.f32 %v103, 0.0
  %v105 = vlaneseq
  %v106 = vshrl.u32 %v105, 7
  %v107 = vsub.s32 1, %v106
  %v108 = vrot.slane %v19, %v107
  %v110 = vsel %vm25, %v104, 0
  %v113 = vsel %vm29, %v18, 0
  %115 = vmatprep.subr.mxu0 0.0
  %116 = vmatpush1.msra.mxu0 0.0
  %117 = vmatprep.subr.mxu0 0.0
  %118 = vmatpush1.msra.mxu0 0.0
  %119 = vmatprep.subr.mxu0 0.0
  %120 = vmatpush1.msra.mxu0 0.0
  %121 = vmatprep.subr.mxu0 0.0
  %122 = vmatpush1.msra.mxu0 0.0
  %123 = vmatprep.subr.mxu0 0.0
  %124 = vmatpush1.msra.mxu0 0.0
  %125 = vmatprep.subr.mxu0 0.0
  %126 = vmatpush1.msra.mxu0 0.0
  %127 = vmatprep.subr.mxu0 0.0
  %128 = vmatpush1.msra.mxu0 0.0
  %129 = vmatprep.subr.mxu0 0.0
  %130 = vmatpush1.msra.mxu0 0.0
  %131 = vmatprep.subr.mxu0 0.0
  %132 = vmatpush1.msra.mxu0 0.0
  %133 = vmatprep.subr.mxu0 0.0
  %134 = vmatpush1.msra.mxu0 0.0
  %135 = vmatprep.subr.mxu0 0.0
  %136 = vmatpush1.msra.mxu0 0.0
  %137 = vmatprep.subr.mxu0 0.0
  %138 = vmatpush1.msra.mxu0 0.0
  %139 = vmatprep.subr.mxu0 0.0
  %140 = vmatpush1.msra.mxu0 %v113
  %141 = vmatprep.subr.mxu0 0.0
  %142 = vmatpush1.msra.mxu0 %v17
  %143 = vmatprep.subr.mxu0 0.0
  %144 = vmatpush1.msra.mxu0 %v16
  %145 = vmatprep.subr.mxu0 0.0
  %146 = vmatpush1.msra.mxu0 %v15
  %147 = vmatprep.subr.mxu0 0.0
  %148 = vmatpush2.msra.mxu0 0.0
  %149 = vmatprep.subr.mxu0 0.0
  %150 = vmatpush2.msra.mxu0 0.0
  %151 = vmatprep.subr.mxu0 0.0
  %152 = vmatpush2.msra.mxu0 0.0
  %153 = vmatprep.subr.mxu0 0.0
  %154 = vmatpush2.msra.mxu0 0.0
  %155 = vmatprep.subr.mxu0 0.0
  %156 = vmatpush2.msra.mxu0 0.0
  %157 = vmatprep.subr.mxu0 0.0
  %158 = vmatpush2.msra.mxu0 0.0
  %159 = vmatprep.subr.mxu0 0.0
  %160 = vmatpush2.msra.mxu0 0.0
  %161 = vmatprep.subr.mxu0 0.0
  %162 = vmatpush2.msra.mxu0 0.0
  %163 = vmatprep.subr.mxu0 0.0
  %164 = vmatpush2.msra.mxu0 0.0
  %165 = vmatprep.subr.mxu0 0.0
  %166 = vmatpush2.msra.mxu0 0.0
  %167 = vmatprep.subr.mxu0 0.0
  %168 = vmatpush2.msra.mxu0 0.0
  %169 = vmatprep.subr.mxu0 0.0
  %170 = vmatpush2.msra.mxu0 0.0
  %171 = vmatprep.subr.mxu0 0.0
  %172 = vmatpush2.msra.mxu0 0.0
  %173 = vmatprep.subr.mxu0 0.0
  %174 = vmatpush2.msra.mxu0 0.0
  %175 = vmatprep.subr.mxu0 0.0
  %176 = vmatpush2.msra.mxu0 0.0
  %177 = vmatprep.subr.mxu0 0.0
  %178 = vmatpush2.msra.mxu0 0.0
  %179 = vmatprep.mubr.f32.mxu0 0.0
  %180 = vmatmul.mubr.f32.gmra.mxu0 %v110
  %v181 = vpop.f32.mrf.mxu0
  %v182 = vadd.f32 %v108, %v181
  %v183 = vpop.f32.mrf.mxu0
  %184 = vdwg.mxu0
  %v185 = vadd.f32 %v182, %v104
  %v186 = vmax.f32 %v185, 0.0
  %v187 = vlaneseq
  %v188 = vshrl.u32 %v187, 7
  %v189 = vsub.s32 2, %v188
  %v190 = vrot.slane %v19, %v189
  %v191 = vmul.f32 %v186, %v190
  %v192 = vsel %vm25, %v191, 0.0
  %193 = vadd.xlane.f32.xlu0 %v192
  %v194 = vpop.xlane.xlu0 %193
  %v195 = vlaneseq
  %v196 = vshrl.u32 %v195, 7
  %v197 = vsub.s32 3, %v196
  %v198 = vrot.slane %v19, %v197
  %v199 = vadd.f32 %v194, %v198
  %vm200 = vcmask 7168
  %201 = vst.msk [vmem:[%s2] sm:$0xff] %vm200, %v199
  // Predicated region
  $region10: #{breast_cancer_model_forward.1} parent=0 // pred_check
    _
  $region11: #{breast_cancer_model_forward.1} parent=0 // pred_check_branch
    %203 = sbr.rel (0) target = $region13
  $region12: #{breast_cancer_model_forward.1} parent=0 // pred_region
    _
  $region13: #{breast_cancer_model_forward.1} parent=0 // pred_fallthru
    _
  // Predicated region
  $region14: #{breast_cancer_model_forward.1} parent=0 // pred_check
    _
  $region15: #{breast_cancer_model_forward.1} parent=0 // pred_check_branch
    %205 = sbr.rel (0) target = $region17
  $region16: #{breast_cancer_model_forward.1} parent=0 // pred_region
    _
  $region17: #{breast_cancer_model_forward.1} parent=0 // pred_fallthru
    _

</llo_original>
